<compile_context>
chip_gen: v7x
topology: tpu7x:2x2x1
jax: 0.10.0
libtpu: 0.0.40
codegen_flags: <defaults>
</compile_context>

<pallas_src>
import jax
import jax.numpy as jnp
from jax.experimental import pallas as pl
from jax.experimental.pallas import tpu as pltpu


_LANE = 512                      # lane width of the flattened layout (mult of 128)
_TILE_BYTES = 1 << 20            # ~1 MiB per input tile -> ~6 MiB per step,
                                 # ~12 MiB double-buffered on all generations
_VMEM_LIMIT = 32 * 1024 * 1024   # explicit scoped-VMEM budget (safe on v5e/v6e/v7x)
_MIN_GRID_STEPS = 8              # keep both v7x TensorCores busy on small batches


def _pli_mods_kernel(t_ref, d_ref, r_ref, o_ref):
    # t/d/r refs: (TR, LANES)    o ref: (3, TR, LANES)
    t = t_ref[...]
    d = d_ref[...].astype(jnp.float32)
    r = r_ref[...].astype(jnp.float32)
    two_d = 2.0 * d
    # Three direct sub-view stores (no stacked temporary, lower vreg pressure).
    o_ref[0] = t
    o_ref[1] = (r * jnp.cos(two_d)).astype(o_ref.dtype)
    o_ref[2] = (r * jnp.sin(two_d)).astype(o_ref.dtype)


def _round_up(x, m):
    return ((x + m - 1) // m) * m


def _choose_rows(total, sub, max_rows, batch):
    """Largest row-tile dividing `total`, multiple of `sub`, <= max_rows.

    Prefers tiles that give at least _MIN_GRID_STEPS total grid steps (v7x
    dual-TensorCore balance).  Returns `total` itself (full-extent block) if
    no sublane-multiple divisor exists, or None if no zero-copy tiling fits.
    """
    hi = min(total, max_rows)
    divisors = [t for t in range(sub, hi + 1, sub) if total % t == 0]
    if not divisors:
        return total if total <= max_rows else None
    good = [t for t in divisors if batch * (total // t) >= _MIN_GRID_STEPS]
    return max(good) if good else max(divisors)


def _cost(n, hw, itemsize):
    return pl.CostEstimate(
        flops=4 * n * hw,
        transcendentals=2 * n * hw,
        bytes_accessed=6 * n * hw * itemsize,
    )


def _call(t, d, r, out_shape, grid, in_spec, out_spec, cost):
    return pl.pallas_call(
        _pli_mods_kernel,
        out_shape=out_shape,
        grid=grid,
        in_specs=[in_spec, in_spec, in_spec],
        out_specs=out_spec,
        compiler_params=pltpu.CompilerParams(
            dimension_semantics=("parallel", "parallel"),
            vmem_limit_bytes=_VMEM_LIMIT,
        ),
        cost_estimate=cost,
    )(t, d, r)


def pli_mods(trans, dir_, ret, scale=None):
    """JAX/Pallas equivalent of PLIMods.forward.

    trans, dir_, ret: arrays of shape (N, 1, H, W) or (N, H, W), same dtype.
    Returns array of shape (N, 3, H, W).
    """
    assert trans.shape == dir_.shape == ret.shape, (
        f"Differing shapes found for input modalities "
        f"{trans.shape}, {dir_.shape}, {ret.shape}"
    )
    assert trans.dtype == dir_.dtype == ret.dtype, (
        f"Differing dtypes found for input modalities "
        f"{trans.dtype}, {dir_.dtype}, {ret.dtype}"
    )
    if trans.ndim == 3:
        trans, dir_, ret = trans[:, None], dir_[:, None], ret[:, None]
    N, C, H, W = trans.shape
    assert C == 1, f"expected single-channel modalities, got C={C}"

    if scale is not None:
        # TODO(synk): F.interpolate(mode='bilinear', align_corners=False)
        # resize path not implemented as a Pallas kernel; only scale=None.
        raise NotImplementedError("scale != None not supported")

    dtype = trans.dtype
    itemsize = jnp.dtype(dtype).itemsize
    sub = max(8, 32 // max(1, itemsize))     # min sublane multiple by dtype
    hw = H * W
    cost = _cost(N, hw, itemsize)

    # Tiny inputs: padding + launch/pipeline overhead dominates; plain XLA wins.
    if hw < sub * _LANE:
        two_d = 2.0 * dir_.astype(jnp.float32)
        c1 = (ret.astype(jnp.float32) * jnp.cos(two_d)).astype(dtype)
        c2 = (ret.astype(jnp.float32) * jnp.sin(two_d)).astype(dtype)
        return jnp.concatenate((trans, c1, c2), axis=1)

    # Path A: native NCHW layout, zero-copy, when W is lane-aligned.
    if W % 128 == 0:
        th_max = max(1, _TILE_BYTES // (W * itemsize))
        th = _choose_rows(H, sub, th_max, N)
        if th is not None:
            grid = (N, H // th)
            in_spec = pl.BlockSpec((None, None, th, W), lambda n, h: (n, 0, h, 0))
            out_spec = pl.BlockSpec((None, 3, th, W), lambda n, h: (n, 0, h, 0))
            return _call(trans, dir_, ret,
                         jax.ShapeDtypeStruct((N, 3, H, W), dtype),
                         grid, in_spec, out_spec, cost)

    # Path B: flattened (N, rows, _LANE) layout; the reshape of a contiguous
    # row-major array is a bitcast, so this is also zero-copy.
    tr_max = max(sub, _TILE_BYTES // (_LANE * itemsize))
    if hw % _LANE == 0:
        rows = hw // _LANE
        tr = _choose_rows(rows, sub, tr_max, N)
        if tr is not None:
            t2 = trans.reshape(N, rows, _LANE)
            d2 = dir_.reshape(N, rows, _LANE)
            r2 = ret.reshape(N, rows, _LANE)
            grid = (N, rows // tr)
            in_spec = pl.BlockSpec((None, tr, _LANE), lambda n, s: (n, s, 0))
            out_spec = pl.BlockSpec((None, 3, tr, _LANE), lambda n, s: (n, 0, s, 0))
            out = _call(t2, d2, r2,
                        jax.ShapeDtypeStruct((N, 3, rows, _LANE), dtype),
                        grid, in_spec, out_spec, cost)
            return out.reshape(N, 3, H, W)

    # Path C: ragged hw -> pad in the wrapper so the kernel never reads OOB.
    # Extra HBM copy; only taken when neither zero-copy layout applies.
    rows = pl.cdiv(hw, _LANE)
    tr = min(tr_max, _round_up(rows, sub))
    rows_pad = _round_up(rows, tr)
    hw_pad = rows_pad * _LANE

    def prep(x):
        x = x.reshape(N, hw)
        x = jnp.pad(x, ((0, 0), (0, hw_pad - hw)))
        return x.reshape(N, rows_pad, _LANE)

    t2, d2, r2 = prep(trans), prep(dir_), prep(ret)
    grid = (N, rows_pad // tr)
    in_spec = pl.BlockSpec((None, tr, _LANE), lambda n, s: (n, s, 0))
    out_spec = pl.BlockSpec((None, 3, tr, _LANE), lambda n, s: (n, 0, s, 0))
    out = _call(t2, d2, r2,
                jax.ShapeDtypeStruct((N, 3, rows_pad, _LANE), dtype),
                grid, in_spec, out_spec, cost)
    out = out.reshape(N, 3, hw_pad)[:, :, :hw]
    return out.reshape(N, 3, H, W)


def _reference(trans, dir_, ret):
    if trans.ndim == 3:
        trans, dir_, ret = trans[:, None], dir_[:, None], ret[:, None]
    dft0 = trans
    dft1 = ret * jnp.cos(2 * dir_)
    dft2 = ret * jnp.sin(2 * dir_)
    return jnp.concatenate((dft0, dft1, dft2), axis=1)


def _check(trans, dir_, ret, tag):
    out = jax.block_until_ready(pli_mods(trans, dir_, ret))
    ref = _reference(trans, dir_, ret)
    assert out.shape == ref.shape, (tag, out.shape, ref.shape)
    assert jnp.allclose(out, ref, atol=1e-5, rtol=1e-5), (
        tag, float(jnp.max(jnp.abs(out - ref))))


if __name__ == "__main__":
    key = jax.random.PRNGKey(0)

    # Primary case: exercises the flattened zero-copy kernel path (Path B).
    k1, k2, k3, k4, k5, k6 = jax.random.split(key, 6)
    N, H, W = 2, 64, 64
    trans = jax.random.uniform(k1, (N, 1, H, W), dtype=jnp.float32)
    dir_ = jax.random.uniform(k2, (N, 1, H, W), dtype=jnp.float32) * jnp.pi
    ret = jax.random.uniform(k3, (N, 1, H, W), dtype=jnp.float32)
    _check(trans, dir_, ret, "flat")

    # Native-layout kernel path (Path A: W multiple of 128), NHW input rank.
    N2, H2, W2 = 2, 40, 128
    trans2 = jax.random.uniform(k4, (N2, H2, W2), dtype=jnp.float32)
    dir2 = jax.random.uniform(k5, (N2, H2, W2), dtype=jnp.float32) * jnp.pi
    ret2 = jax.random.uniform(k6, (N2, H2, W2), dtype=jnp.float32)
    _check(trans2, dir2, ret2, "nchw")

    # Tiny-input fallback path (plain jnp, no kernel launch).
    _check(trans[:, :, :16, :16], dir_[:, :, :16, :16], ret[:, :, :16, :16], "tiny")

    print("KERNEL_OK")
</pallas_src>

<mosaic_0001>
module attributes {stable_mosaic.version = 11 : i64} {
  func.func @_pli_mods_kernel(%arg0: i32, %arg1: i32, %arg2: memref<1x8x512xf32, #tpu.memory_space<vmem>>, %arg3: memref<1x8x512xf32, #tpu.memory_space<vmem>>, %arg4: memref<1x8x512xf32, #tpu.memory_space<vmem>>, %arg5: memref<1x3x8x512xf32, #tpu.memory_space<vmem>>) attributes {dimension_semantics = [#tpu.dimension_semantics<parallel>, #tpu.dimension_semantics<parallel>], iteration_bounds = array<i64: 2, 1>, scalar_prefetch = 0 : i64, scratch_operands = 0 : i64, tpu.core_type = #tpu.core_type<tc>, window_params = [{transform_indices = @transform_0, window_bounds = array<i64: 1, 8, 512>}, {transform_indices = @transform_1, window_bounds = array<i64: 1, 8, 512>}, {transform_indices = @transform_2, window_bounds = array<i64: 1, 8, 512>}, {transform_indices = @transform_3, window_bounds = array<i64: 1, 3, 8, 512>}]} {
    %c0 = arith.constant 0 : index
    %c0_0 = arith.constant 0 : index
    %c0_1 = arith.constant 0 : index
    %0 = vector.load %arg2[%c0, %c0_0, %c0_1] : memref<1x8x512xf32, #tpu.memory_space<vmem>>, vector<1x8x512xf32>
    %1 = vector.shape_cast %0 : vector<1x8x512xf32> to vector<8x512xf32>
    %c0_2 = arith.constant 0 : index
    %c0_3 = arith.constant 0 : index
    %c0_4 = arith.constant 0 : index
    %2 = vector.load %arg3[%c0_2, %c0_3, %c0_4] : memref<1x8x512xf32, #tpu.memory_space<vmem>>, vector<1x8x512xf32>
    %3 = vector.shape_cast %2 : vector<1x8x512xf32> to vector<8x512xf32>
    %c0_5 = arith.constant 0 : index
    %c0_6 = arith.constant 0 : index
    %c0_7 = arith.constant 0 : index
    %4 = vector.load %arg4[%c0_5, %c0_6, %c0_7] : memref<1x8x512xf32, #tpu.memory_space<vmem>>, vector<1x8x512xf32>
    %5 = vector.shape_cast %4 : vector<1x8x512xf32> to vector<8x512xf32>
    %cst = arith.constant 2.000000e+00 : f32
    %6 = vector.broadcast %cst : f32 to vector<8x512xf32>
    %7 = arith.mulf %6, %3 : vector<8x512xf32>
    %c0_8 = arith.constant 0 : index
    %c0_9 = arith.constant 0 : index
    %c0_10 = arith.constant 0 : index
    %c0_11 = arith.constant 0 : index
    %8 = vector.load %arg5[%c0_8, %c0_9, %c0_10, %c0_11] : memref<1x3x8x512xf32, #tpu.memory_space<vmem>>, vector<1x1x8x512xf32>
    %9 = vector.shape_cast %8 : vector<1x1x8x512xf32> to vector<8x512xf32>
    %10 = vector.shape_cast %1 : vector<8x512xf32> to vector<1x1x8x512xf32>
    tpu.vector_store %arg5[%c0_8, %c0_9, %c0_10, %c0_11], %10 {strides = array<i32>} : memref<1x3x8x512xf32, #tpu.memory_space<vmem>>, vector<1x1x8x512xf32>,
    %11 = math.cos %7 : vector<8x512xf32>
    %12 = arith.mulf %5, %11 : vector<8x512xf32>
    %c0_12 = arith.constant 0 : index
    %c1 = arith.constant 1 : index
    %c0_13 = arith.constant 0 : index
    %c0_14 = arith.constant 0 : index
    %13 = vector.load %arg5[%c0_12, %c1, %c0_13, %c0_14] : memref<1x3x8x512xf32, #tpu.memory_space<vmem>>, vector<1x1x8x512xf32>
    %14 = vector.shape_cast %13 : vector<1x1x8x512xf32> to vector<8x512xf32>
    %15 = vector.shape_cast %12 : vector<8x512xf32> to vector<1x1x8x512xf32>
    tpu.vector_store %arg5[%c0_12, %c1, %c0_13, %c0_14], %15 {strides = array<i32>} : memref<1x3x8x512xf32, #tpu.memory_space<vmem>>, vector<1x1x8x512xf32>,
    %16 = math.sin %7 : vector<8x512xf32>
    %17 = arith.mulf %5, %16 : vector<8x512xf32>
    %c0_15 = arith.constant 0 : index
    %c2 = arith.constant 2 : index
    %c0_16 = arith.constant 0 : index
    %c0_17 = arith.constant 0 : index
    %18 = vector.load %arg5[%c0_15, %c2, %c0_16, %c0_17] : memref<1x3x8x512xf32, #tpu.memory_space<vmem>>, vector<1x1x8x512xf32>
    %19 = vector.shape_cast %18 : vector<1x1x8x512xf32> to vector<8x512xf32>
    %20 = vector.shape_cast %17 : vector<8x512xf32> to vector<1x1x8x512xf32>
    tpu.vector_store %arg5[%c0_15, %c2, %c0_16, %c0_17], %20 {strides = array<i32>} : memref<1x3x8x512xf32, #tpu.memory_space<vmem>>, vector<1x1x8x512xf32>,
    return
  }
  func.func @transform_0(%arg0: i32, %arg1: i32) -> (i32, i32, i32) {
    %c0_i32 = arith.constant 0 : i32
    %c0_i32_0 = arith.constant 0 : i32
    return %arg0, %arg1, %c0_i32 : i32, i32, i32
  }
  func.func @transform_1(%arg0: i32, %arg1: i32) -> (i32, i32, i32) {
    %c0_i32 = arith.constant 0 : i32
    %c0_i32_0 = arith.constant 0 : i32
    return %arg0, %arg1, %c0_i32 : i32, i32, i32
  }
  func.func @transform_2(%arg0: i32, %arg1: i32) -> (i32, i32, i32) {
    %c0_i32 = arith.constant 0 : i32
    %c0_i32_0 = arith.constant 0 : i32
    return %arg0, %arg1, %c0_i32 : i32, i32, i32
  }
  func.func @transform_3(%arg0: i32, %arg1: i32) -> (i32, i32, i32, i32) {
    %c0_i32 = arith.constant 0 : i32
    %c0_i32_0 = arith.constant 0 : i32
    %c0_i32_1 = arith.constant 0 : i32
    return %arg0, %c0_i32, %arg1, %c0_i32_0 : i32, i32, i32, i32
  }
}

</mosaic_0001>

<llo_original>
// kernel: tpu_custom_call.1
$region0: #{tpu_custom_call.1}
  #allocation0 [shape = 'u32[]', space=smem, size = 0x4, offset = 0x4, fixed_abs, tag = 'smem constant byte address 0x4 - core index']
  #allocation1 [shape = 'u32[144,128]{1,0:T(1,128)}', space=vmem, size = 0x12000, scoped, tag = 'internal scratch']
  %s0 = inlined_call_operand.hbm [shape: f32[2,8,512], index: 0, kind: input, shape index: {}]
  %s1 = inlined_call_operand.hbm [shape: f32[2,8,512], index: 1, kind: input, shape index: {}]
  %s2 = inlined_call_operand.hbm [shape: f32[2,8,512], index: 2, kind: input, shape index: {}]
  %s3 = inlined_call_operand.hbm [shape: f32[2,3,8,512], index: 3, kind: output, shape index: {}]
  %s4 = sld [smem:[#allocation0]]
  $region57: #{tpu_custom_call.1} parent=0
    _
  %s6 = ssub.s32 1, %s4
  %s7 = scalar_select 0, %s6, %s4
  $region1: #{tpu_custom_call.1} parent=0
    #allocation2 [shape = 'u8[32768]{0}', space=vmem, size = 0x8000, scoped, tag = 'input window, operand 0']
    #allocation3 [shape = 's32[2]{0}', space=sflag, size = 0x8, scoped, tag = 'scoped memory for tpu_custom_call.1']
    #allocation4 [shape = 's32[2]{0}', space=sflag, size = 0x8, scoped, tag = 'scoped memory for tpu_custom_call.1']
    #allocation5 [shape = 'u8[32768]{0}', space=vmem, size = 0x8000, scoped, tag = 'input window, operand 1']
    #allocation6 [shape = 's32[2]{0}', space=sflag, size = 0x8, scoped, tag = 'scoped memory for tpu_custom_call.1']
    #allocation7 [shape = 'u8[32768]{0}', space=vmem, size = 0x8000, scoped, tag = 'input window, operand 2']
    #allocation8 [shape = 'u8[98304]{0}', space=vmem, size = 0x18000, scoped, tag = 'output window, operand 0']
    %8 = vsyncpa [#allocation3], 0
    %s9 = scalar_lea.sflag [#allocation3], 1
    %10 = vsyncpa %s9, 0
    %11 = vsyncpa [#allocation6], 0
    %s12 = scalar_lea.sflag [#allocation6], 1
    %13 = vsyncpa %s12, 0
    %14 = vsyncpa [#allocation4], 0
    %s15 = scalar_lea.sflag [#allocation4], 1
    %16 = vsyncpa %s15, 0
    loop: start=0, step=1, limit=4
    $region2: #{tpu_custom_call.1} parent=1 // loop_pre_header
      _
    $region3: #{tpu_custom_call.1} parent=1 // loop_header
      %s18 = sphi 0, %s22
      %p19 = scmp.ge.s32.totalorder %s18, 4
      %s25 = sphi 0, %s37
      %s26 = sphi 0, %s33
      %s27 = sphi 0, %s25
      %s28 = sphi 0, %s26
      %s29 = sphi 0, %s27
      %s30 = sphi 0, %s28
      %s42 = sphi 0, %s44
      %s45 = sphi 0, %s42
      %s46 = sphi 0, %s45
      %s62 = sphi 0, %s46
      %s70 = sphi 0, %s72
      %s73 = sphi 0, %s70
      %s74 = sphi 0, %s73
      %s90 = sphi 0, %s74
      %s98 = sphi 0, %s100
      %s101 = sphi 0, %s98
      %s102 = sphi 0, %s101
      %s118 = sphi 0, %s102
      %s126 = sphi 0, %s128
      %s129 = sphi 0, %s126
      %s130 = sphi 0, %s129
      %s146 = sphi 0, %s130
    $region4: #{tpu_custom_call.1} parent=1 // loop_header_branch
      %21 = sbr.rel (%p19) target = $region8
    $region5: #{tpu_custom_call.1} parent=1 // loop_body
      %s23 = ssub.s32 %s18, 1
      %s24 = ssub.s32 %s18, 2
      %s31 = sadd.s32 1, %s26
      %p32 = scmp.ge.s32.totalorder %s31, 1
      %s33 = scalar_select %p32, 0, %s31
      %s34 = sadd.s32 1, %s25
      %s35 = scalar_select %p32, %s34, %s25
      %p36 = scmp.ge.s32.totalorder %s35, 2
      %s37 = scalar_select %p36, 0, %s35
      %s38 = ssub.s32 %s25, %s37
      %s39 = ssub.s32 %s26, %s33
      %s40 = sor.u32 %s38, %s39
      %p41 = scmp.eq.s32.totalorder %s40, 0
      %s43 = sadd.s32 %s42, 1
      %s44 = scalar_select %p41, %s42, %s43
      %p47 = pneg %p41
      %p48 = scmp.eq.s32.totalorder %s18, 1
      %p49 = por %p47, %p48
      %p50 = scmp.ne.s32.totalorder %s42, %s45
      %p51 = scmp.eq.s32.totalorder %s18, 0
      %p52 = por %p50, %p51
      %p53 = scmp.ne.s32.totalorder %s42, %s45
      %p54 = scmp.eq.s32.totalorder %s23, 1
      %p55 = por %p53, %p54
      %p56 = scmp.ne.s32.totalorder %s45, %s46
      %p57 = scmp.eq.s32.totalorder %s23, 0
      %p58 = por %p56, %p57
      %p59 = scmp.ne.s32.totalorder %s45, %s46
      %p60 = scmp.eq.s32.totalorder %s24, 1
      %p61 = por %p59, %p60
      %p63 = scmp.ne.s32.totalorder %s46, %s62
      %p64 = scmp.eq.s32.totalorder %s24, 0
      %p65 = por %p63, %p64
      %s66 = ssub.s32 %s25, %s37
      %s67 = ssub.s32 %s26, %s33
      %s68 = sor.u32 %s66, %s67
      %p69 = scmp.eq.s32.totalorder %s68, 0
      %s71 = sadd.s32 %s70, 1
      %s72 = scalar_select %p69, %s70, %s71
      %p75 = pneg %p69
      %p76 = scmp.eq.s32.totalorder %s18, 1
      %p77 = por %p75, %p76
      %p78 = scmp.ne.s32.totalorder %s70, %s73
      %p79 = scmp.eq.s32.totalorder %s18, 0
      %p80 = por %p78, %p79
      %p81 = scmp.ne.s32.totalorder %s70, %s73
      %p82 = scmp.eq.s32.totalorder %s23, 1
      %p83 = por %p81, %p82
      %p84 = scmp.ne.s32.totalorder %s73, %s74
      %p85 = scmp.eq.s32.totalorder %s23, 0
      %p86 = por %p84, %p85
      %p87 = scmp.ne.s32.totalorder %s73, %s74
      %p88 = scmp.eq.s32.totalorder %s24, 1
      %p89 = por %p87, %p88
      %p91 = scmp.ne.s32.totalorder %s74, %s90
      %p92 = scmp.eq.s32.totalorder %s24, 0
      %p93 = por %p91, %p92
      %s94 = ssub.s32 %s25, %s37
      %s95 = ssub.s32 %s26, %s33
      %s96 = sor.u32 %s94, %s95
      %p97 = scmp.eq.s32.totalorder %s96, 0
      %s99 = sadd.s32 %s98, 1
      %s100 = scalar_select %p97, %s98, %s99
      %p103 = pneg %p97
      %p104 = scmp.eq.s32.totalorder %s18, 1
      %p105 = por %p103, %p104
      %p106 = scmp.ne.s32.totalorder %s98, %s101
      %p107 = scmp.eq.s32.totalorder %s18, 0
      %p108 = por %p106, %p107
      %p109 = scmp.ne.s32.totalorder %s98, %s101
      %p110 = scmp.eq.s32.totalorder %s23, 1
      %p111 = por %p109, %p110
      %p112 = scmp.ne.s32.totalorder %s101, %s102
      %p113 = scmp.eq.s32.totalorder %s23, 0
      %p114 = por %p112, %p113
      %p115 = scmp.ne.s32.totalorder %s101, %s102
      %p116 = scmp.eq.s32.totalorder %s24, 1
      %p117 = por %p115, %p116
      %p119 = scmp.ne.s32.totalorder %s102, %s118
      %p120 = scmp.eq.s32.totalorder %s24, 0
      %p121 = por %p119, %p120
      %s122 = ssub.s32 %s25, %s37
      %s123 = ssub.s32 %s26, %s33
      %s124 = sor.u32 %s122, %s123
      %p125 = scmp.eq.s32.totalorder %s124, 0
      %s127 = sadd.s32 %s126, 1
      %s128 = scalar_select %p125, %s126, %s127
      %p131 = pneg %p125
      %p132 = scmp.eq.s32.totalorder %s18, 1
      %p133 = por %p131, %p132
      %p134 = scmp.ne.s32.totalorder %s126, %s129
      %p135 = scmp.eq.s32.totalorder %s18, 0
      %p136 = por %p134, %p135
      %p137 = scmp.ne.s32.totalorder %s126, %s129
      %p138 = scmp.eq.s32.totalorder %s23, 1
      %p139 = por %p137, %p138
      %p140 = scmp.ne.s32.totalorder %s129, %s130
      %p141 = scmp.eq.s32.totalorder %s23, 0
      %p142 = por %p140, %p141
      %p143 = scmp.ne.s32.totalorder %s129, %s130
      %p144 = scmp.eq.s32.totalorder %s24, 1
      %p145 = por %p143, %p144
      %p147 = scmp.ne.s32.totalorder %s130, %s146
      %p148 = scmp.eq.s32.totalorder %s24, 0
      %p149 = por %p147, %p148
      %p150 = scmp.le.s32.totalorder 1, %s18
      %p151 = scmp.lt.s32.totalorder %s18, 3
      %p152 = pnand %p150, %p151
      %p153 = pneg %p152
      // Predicated region
      $region9: #{tpu_custom_call.1} parent=5 // pred_check
        _
      $region10: #{tpu_custom_call.1} parent=5 // pred_check_branch
        %155 = sbr.rel (%p152) target = $region12
      $region11: #{tpu_custom_call.1} parent=5 // pred_region
        %s156 = ssub.s32 %s18, 1
      $region12: #{tpu_custom_call.1} parent=5 // pred_fallthru
        _
      %p157 = scmp.lt.s32.totalorder %s18, 2
      // Predicated region
      $region13: #{tpu_custom_call.1} parent=5 // pred_check
        %p158 = pneg %p157
      $region14: #{tpu_custom_call.1} parent=5 // pred_check_branch
        %160 = sbr.rel (%p158) target = $region16
      $region15: #{tpu_custom_call.1} parent=5 // pred_region
        // Predicated region
        $region17: #{tpu_custom_call.1} parent=15 // pred_check
          %p161 = pneg %p52
        $region18: #{tpu_custom_call.1} parent=15 // pred_check_branch
          %163 = sbr.rel (%p161) target = $region20
        $region19: #{tpu_custom_call.1} parent=15 // pred_region
          %s164 = sand.u32 %s42, 1
          %s165 = scalar_lea.sflag [#allocation3], %s164
          %s166 = sand.u32 %s42, 1
          %s167 = smul.addr %s166, 32
          %s168 = scalar_lea.vmem [#allocation2], %s167
          %s170 = ssub.s32 512, 512
          %171 = vsyncadd %s165, %s170
          %s172 = smul.addr %s26, 4
          %s173 = smul.addr %s25, 4
          %s174 = sadd.s32 %s172, %s173
          %s175 = smul.addr %s174, 128
          %s176 = scalar_lea.hbm %s0, %s175
          %s178 = sshll.u32 %s168, 4
          %s179 = int_to_ptr.vmem [resolvable:$true] %s178
          %181 = dma.hbm_to_vmem [thread:$0]  %s176, 512, %s179, %s165
        $region20: #{tpu_custom_call.1} parent=15 // pred_fallthru
          _
        // Predicated region
        $region21: #{tpu_custom_call.1} parent=15 // pred_check
          %p182 = pneg %p80
        $region22: #{tpu_custom_call.1} parent=15 // pred_check_branch
          %184 = sbr.rel (%p182) target = $region24
        $region23: #{tpu_custom_call.1} parent=15 // pred_region
          %s185 = sand.u32 %s18, 1
          %s186 = scalar_lea.sflag [#allocation6], %s185
          %s187 = sand.u32 %s70, 1
          %s188 = smul.addr %s187, 32
          %s189 = scalar_lea.vmem [#allocation5], %s188
          %s191 = ssub.s32 512, 512
          %192 = vsyncadd %s186, %s191
          %s193 = smul.addr %s26, 4
          %s194 = smul.addr %s25, 4
          %s195 = sadd.s32 %s193, %s194
          %s196 = smul.addr %s195, 128
          %s197 = scalar_lea.hbm %s1, %s196
          %s199 = sshll.u32 %s189, 4
          %s200 = int_to_ptr.vmem [resolvable:$true] %s199
          %202 = dma.hbm_to_vmem [thread:$0]  %s197, 512, %s200, %s186
        $region24: #{tpu_custom_call.1} parent=15 // pred_fallthru
          _
        // Predicated region
        $region25: #{tpu_custom_call.1} parent=15 // pred_check
          %p203 = pneg %p108
        $region26: #{tpu_custom_call.1} parent=15 // pred_check_branch
          %205 = sbr.rel (%p203) target = $region28
        $region27: #{tpu_custom_call.1} parent=15 // pred_region
          %s206 = sand.u32 %s18, 1
          %s207 = scalar_lea.sflag [#allocation6], %s206
          %s208 = sand.u32 %s98, 1
          %s209 = smul.addr %s208, 32
          %s210 = scalar_lea.vmem [#allocation7], %s209
          %s212 = ssub.s32 512, 512
          %213 = vsyncadd %s207, %s212
          %s214 = smul.addr %s26, 4
          %s215 = smul.addr %s25, 4
          %s216 = sadd.s32 %s214, %s215
          %s217 = smul.addr %s216, 128
          %s218 = scalar_lea.hbm %s2, %s217
          %s220 = sshll.u32 %s210, 4
          %s221 = int_to_ptr.vmem [resolvable:$true] %s220
          %223 = dma.hbm_to_vmem [thread:$0]  %s218, 512, %s221, %s207
        $region28: #{tpu_custom_call.1} parent=15 // pred_fallthru
          _
      $region16: #{tpu_custom_call.1} parent=5 // pred_fallthru
        _
      %p224 = scmp.le.s32.totalorder 1, %s18
      %p225 = scmp.lt.s32.totalorder %s18, 3
      %p226 = pnand %p224, %p225
      %p227 = pneg %p226
      // Predicated region
      $region29: #{tpu_custom_call.1} parent=5 // pred_check
        _
      $region30: #{tpu_custom_call.1} parent=5 // pred_check_branch
        %229 = sbr.rel (%p226) target = $region32
      $region31: #{tpu_custom_call.1} parent=5 // pred_region
        %s230 = ssub.s32 %s18, 1
        %s231 = sand.u32 %s45, 1
        %s232 = scalar_lea.sflag [#allocation3], %s231
        %s233 = sand.u32 %s45, 1
        %s234 = smul.addr %s233, 32
        %s235 = scalar_lea.vmem [#allocation2], %s234
        // Predicated region
        $region33: #{tpu_custom_call.1} parent=31 // pred_check
          %p236 = pneg %p58
        $region34: #{tpu_custom_call.1} parent=31 // pred_check_branch
          %238 = sbr.rel (%p236) target = $region36
        $region35: #{tpu_custom_call.1} parent=31 // pred_region
          %239 = dma.done %s232, 512
        $region36: #{tpu_custom_call.1} parent=31 // pred_fallthru
          _
        %s240 = sand.u32 %s23, 1
        %s241 = scalar_lea.sflag [#allocation6], %s240
        %s242 = sand.u32 %s73, 1
        %s243 = smul.addr %s242, 32
        %s244 = scalar_lea.vmem [#allocation5], %s243
        // Predicated region
        $region37: #{tpu_custom_call.1} parent=31 // pred_check
          %p245 = pneg %p86
        $region38: #{tpu_custom_call.1} parent=31 // pred_check_branch
          %247 = sbr.rel (%p245) target = $region40
        $region39: #{tpu_custom_call.1} parent=31 // pred_region
          %248 = dma.done %s241, 512
        $region40: #{tpu_custom_call.1} parent=31 // pred_fallthru
          _
        %s249 = sand.u32 %s23, 1
        %s250 = scalar_lea.sflag [#allocation6], %s249
        %s251 = sand.u32 %s101, 1
        %s252 = smul.addr %s251, 32
        %s253 = scalar_lea.vmem [#allocation7], %s252
        // Predicated region
        $region41: #{tpu_custom_call.1} parent=31 // pred_check
          %p254 = pneg %p114
        $region42: #{tpu_custom_call.1} parent=31 // pred_check_branch
          %256 = sbr.rel (%p254) target = $region44
        $region43: #{tpu_custom_call.1} parent=31 // pred_region
          %257 = dma.done %s250, 512
        $region44: #{tpu_custom_call.1} parent=31 // pred_fallthru
          _
        %s258 = sand.u32 %s45, 1
        %s259 = scalar_lea.sflag [#allocation3], %s258
        %s260 = sand.u32 %s45, 1
        %s261 = smul.addr %s260, 32
        %s262 = scalar_lea.vmem [#allocation2], %s261
        %p263 = pneg %p58
        %p264 = pneg %p55
        %s265 = sand.u32 %s23, 1
        %s266 = scalar_lea.sflag [#allocation6], %s265
        %s267 = sand.u32 %s73, 1
        %s268 = smul.addr %s267, 32
        %s269 = scalar_lea.vmem [#allocation5], %s268
        %p270 = pneg %p86
        %p271 = pneg %p83
        %s272 = sand.u32 %s23, 1
        %s273 = scalar_lea.sflag [#allocation6], %s272
        %s274 = sand.u32 %s101, 1
        %s275 = smul.addr %s274, 32
        %s276 = scalar_lea.vmem [#allocation7], %s275
        %p277 = pneg %p114
        %p278 = pneg %p111
        %p279 = pneg %p142
        %p280 = pneg %p139
        %s281 = sand.u32 %s129, 1
        %s282 = scalar_lea.sflag [#allocation4], %s281
        %s283 = sand.u32 %s129, 1
        %s284 = smul.addr %s283, 96
        %s285 = scalar_lea.vmem [#allocation8], %s284
        %v286 = vld [vmem:[%s235] sm:$0xff]
        %v287 = vld [vmem:[%s235 + $0x8] sm:$0xff]
        %v288 = vld [vmem:[%s235 + $0x10] sm:$0xff]
        %v289 = vld [vmem:[%s235 + $0x18] sm:$0xff]
        %v290 = vld [vmem:[%s244] sm:$0xff]
        %v291 = vld [vmem:[%s244 + $0x8] sm:$0xff]
        %v292 = vld [vmem:[%s244 + $0x10] sm:$0xff]
        %v293 = vld [vmem:[%s244 + $0x18] sm:$0xff]
        %v294 = vld [vmem:[%s253] sm:$0xff]
        %v295 = vld [vmem:[%s253 + $0x8] sm:$0xff]
        %v296 = vld [vmem:[%s253 + $0x10] sm:$0xff]
        %v297 = vld [vmem:[%s253 + $0x18] sm:$0xff]
        %v298 = vmul.f32 %v290, 2.0
        %v299 = vmul.f32 %v291, 2.0
        %v300 = vmul.f32 %v292, 2.0
        %v301 = vmul.f32 %v293, 2.0
        %302 = vst [vmem:[%s285] sm:$0xff] %v286
        %303 = vst [vmem:[%s285 + $0x8] sm:$0xff] %v287
        %304 = vst [vmem:[%s285 + $0x10] sm:$0xff] %v288
        %305 = vst [vmem:[%s285 + $0x18] sm:$0xff] %v289
        %v306 = vand.u32 2147483647, %v298
        %vm307 = vcmp.le.f32.partialorder %v306, 0.7853982
        %vm308 = vcmp.lt.s32.totalorder %v298, 0
        %v309 = vand.u32 %v298, 2139095040
        %v310 = vshrl.u32 %v309, 23
        %v311 = vsub.s32 %v310, 127
        %v312 = vand.u32 2147483647, %v298
        %v313 = vand.u32 %v312, 8388607
        %v314 = vor.u32 %v313, 8388608
        %v315 = vsub.s32 0, %v314
        %v316 = vadd.s32 %v311, 1
        %vm317 = vcmp.gt.s32.totalorder %v316, 0
        %v318 = vsel %vm317, %v316, 0
        %v319 = vshrl.u32 %v318, 5
        %v320 = vand.u32 %v318, 31
        %v321 = vsub.s32 32, %v320
        %v322 = vshrl.u32 683565275, %v321
        %v323 = vshll.u32 683565275, %v320
        %v324 = vshrl.u32 2475754826, %v321
        %v325 = vor.u32 %v323, %v324
        %v326 = vshll.u32 2475754826, %v320
        %v327 = vshrl.u32 2131351028, %v321
        %v328 = vor.u32 %v326, %v327
        %v329 = vshll.u32 2131351028, %v320
        %v330 = vshrl.u32 2102212464, %v321
        %v331 = vor.u32 %v329, %v330
        %v332 = vshll.u32 2102212464, %v320
        %v333 = vshrl.u32 920167782, %v321
        %v334 = vor.u32 %v332, %v333
        %v335 = vshll.u32 920167782, %v320
        %v336 = vshrl.u32 1326507024, %v321
        %v337 = vor.u32 %v335, %v336
        %vm338 = vcmp.lt.s32.totalorder %v319, 1
        %vm339 = vcmp.lt.s32.totalorder %v319, 2
        %vm340 = vcmp.lt.s32.totalorder %v319, 3
        %vm341 = vcmp.lt.s32.totalorder %v319, 4
        %v342 = vsel %vm338, %v322, %v325
        %v343 = vsel %vm341, %v331, 2102212464
        %v344 = vsel %vm340, %v328, %v343
        %v345 = vsel %vm339, %v342, %v344
        %v346 = vsel %vm338, %v325, %v328
        %v347 = vsel %vm341, %v334, 920167782
        %v348 = vsel %vm340, %v331, %v347
        %v349 = vsel %vm339, %v346, %v348
        %v350 = vsel %vm338, %v328, %v331
        %v351 = vsel %vm341, %v337, 1326507024
        %v352 = vsel %vm340, %v334, %v351
        %v353 = vsel %vm339, %v350, %v352
        %v354 = vshll.u32 %v314, 8
        %v355 = vmul.u32.u64.compose %v354, %v353
        %v356 = vextract.low.u32 %v355
        %v357 = vextract.high.u32 %v355
        %v358 = vmul.u32.u64.compose %v354, %v349
        %v359 = vextract.low.u32 %v358
        %v360 = vextract.high.u32 %v358
        %v361 = vmul.u32 %v354, %v345
        %v362 = vadd.s32 %v357, %v359
        %vm363 = vc.u32 %v357, %v359
        %v364 = vadd.s32 %v360, 1
        %v365 = vsel %vm363, %v364, %v360
        %v366 = vadd.s32 %v361, %v365
        %v367 = vadd.s32 %v366, 536870912
        %v368 = vshrl.u32 %v367, 30
        %v369 = vshll.u32 %v368, 30
        %v370 = vsub.s32 %v366, %v369
        %vm371 = vcmp.lt.s32.totalorder %v370, 0
        %v372 = vsub.s32 0, %v370
        %v373 = vsel %vm371, %v372, %v370
        %v374 = vclz %v373
        %v375 = vsub.s32 %v374, 2
        %vm376 = vcmp.gt.s32.totalorder 0, %v375
        %v377 = vsel %vm376, 0, %v375
        %v378 = vsub.s32 32, %v377
        %v379 = vshll.u32 %v370, %v377
        %v380 = vshrl.u32 %v362, %v378
        %v381 = vor.u32 %v379, %v380
        %v382 = vsub.s32 4294967266, %v377
        %v383 = vadd.s32 %v382, 127
        %v384 = vshll.u32 %v383, 23
        %v385 = vor.u32 4788187, %v384
        %v386 = vand.u32 2147483647, %v385
        %v388 = vcvt.s32.f32 %v381
        %v389 = vmul.f32 %v388, %v386
        %v390 = vxor.u32 %v389, 2147483648
        %v391 = vsel %vm308, %v390, %v389
        %v392 = vsub.s32 4, %v368
        %v393 = vsel %vm308, %v392, %v368
        %v394 = vsel %vm307, %v298, %v391
        %v395 = vsel %vm307, 0, %v393
        %v396 = vcosq.f32.pop %v394
        %v397 = vsinq.f32.pop %v394
        %vm398 = vweird.f32 %v298
        %v399 = vand.u32 %v395, 3
        %vm400 = vcmp.lt.s32.totalorder %v399, 2
        %vm401 = vcmp.eq.s32.totalorder %v399, 0
        %v402 = vxor.u32 %v397, 2147483648
        %v403 = vsel %vm401, %v396, %v402
        %vm404 = vcmp.eq.s32.totalorder %v399, 2
        %v405 = vxor.u32 %v396, 2147483648
        %v406 = vsel %vm404, %v405, %v397
        %v407 = vsel %vm400, %v403, %v406
        %v408 = vsel %vm398, nan, %v407
        %v409 = vand.u32 2147483647, %v299
        %vm410 = vcmp.le.f32.partialorder %v409, 0.7853982
        %vm411 = vcmp.lt.s32.totalorder %v299, 0
        %v412 = vand.u32 %v299, 2139095040
        %v413 = vshrl.u32 %v412, 23
        %v414 = vsub.s32 %v413, 127
        %v415 = vand.u32 2147483647, %v299
        %v416 = vand.u32 %v415, 8388607
        %v417 = vor.u32 %v416, 8388608
        %v418 = vsub.s32 0, %v417
        %v419 = vadd.s32 %v414, 1
        %vm420 = vcmp.gt.s32.totalorder %v419, 0
        %v421 = vsel %vm420, %v419, 0
        %v422 = vshrl.u32 %v421, 5
        %v423 = vand.u32 %v421, 31
        %v424 = vsub.s32 32, %v423
        %v425 = vshrl.u32 683565275, %v424
        %v426 = vshll.u32 683565275, %v423
        %v427 = vshrl.u32 2475754826, %v424
        %v428 = vor.u32 %v426, %v427
        %v429 = vshll.u32 2475754826, %v423
        %v430 = vshrl.u32 2131351028, %v424
        %v431 = vor.u32 %v429, %v430
        %v432 = vshll.u32 2131351028, %v423
        %v433 = vshrl.u32 2102212464, %v424
        %v434 = vor.u32 %v432, %v433
        %v435 = vshll.u32 2102212464, %v423
        %v436 = vshrl.u32 920167782, %v424
        %v437 = vor.u32 %v435, %v436
        %v438 = vshll.u32 920167782, %v423
        %v439 = vshrl.u32 1326507024, %v424
        %v440 = vor.u32 %v438, %v439
        %vm441 = vcmp.lt.s32.totalorder %v422, 1
        %vm442 = vcmp.lt.s32.totalorder %v422, 2
        %vm443 = vcmp.lt.s32.totalorder %v422, 3
        %vm444 = vcmp.lt.s32.totalorder %v422, 4
        %v445 = vsel %vm441, %v425, %v428
        %v446 = vsel %vm444, %v434, 2102212464
        %v447 = vsel %vm443, %v431, %v446
        %v448 = vsel %vm442, %v445, %v447
        %v449 = vsel %vm441, %v428, %v431
        %v450 = vsel %vm444, %v437, 920167782
        %v451 = vsel %vm443, %v434, %v450
        %v452 = vsel %vm442, %v449, %v451
        %v453 = vsel %vm441, %v431, %v434
        %v454 = vsel %vm444, %v440, 1326507024
        %v455 = vsel %vm443, %v437, %v454
        %v456 = vsel %vm442, %v453, %v455
        %v457 = vshll.u32 %v417, 8
        %v458 = vmul.u32.u64.compose %v457, %v456
        %v459 = vextract.low.u32 %v458
        %v460 = vextract.high.u32 %v458
        %v461 = vmul.u32.u64.compose %v457, %v452
        %v462 = vextract.low.u32 %v461
        %v463 = vextract.high.u32 %v461
        %v464 = vmul.u32 %v457, %v448
        %v465 = vadd.s32 %v460, %v462
        %vm466 = vc.u32 %v460, %v462
        %v467 = vadd.s32 %v463, 1
        %v468 = vsel %vm466, %v467, %v463
        %v469 = vadd.s32 %v464, %v468
        %v470 = vadd.s32 %v469, 536870912
        %v471 = vshrl.u32 %v470, 30
        %v472 = vshll.u32 %v471, 30
        %v473 = vsub.s32 %v469, %v472
        %vm474 = vcmp.lt.s32.totalorder %v473, 0
        %v475 = vsub.s32 0, %v473
        %v476 = vsel %vm474, %v475, %v473
        %v477 = vclz %v476
        %v478 = vsub.s32 %v477, 2
        %vm479 = vcmp.gt.s32.totalorder 0, %v478
        %v480 = vsel %vm479, 0, %v478
        %v481 = vsub.s32 32, %v480
        %v482 = vshll.u32 %v473, %v480
        %v483 = vshrl.u32 %v465, %v481
        %v484 = vor.u32 %v482, %v483
        %v485 = vsub.s32 4294967266, %v480
        %v486 = vadd.s32 %v485, 127
        %v487 = vshll.u32 %v486, 23
        %v488 = vor.u32 4788187, %v487
        %v489 = vand.u32 2147483647, %v488
        %v491 = vcvt.s32.f32 %v484
        %v492 = vmul.f32 %v491, %v489
        %v493 = vxor.u32 %v492, 2147483648
        %v494 = vsel %vm411, %v493, %v492
        %v495 = vsub.s32 4, %v471
        %v496 = vsel %vm411, %v495, %v471
        %v497 = vsel %vm410, %v299, %v494
        %v498 = vsel %vm410, 0, %v496
        %v499 = vcosq.f32.pop %v497
        %v500 = vsinq.f32.pop %v497
        %vm501 = vweird.f32 %v299
        %v502 = vand.u32 %v498, 3
        %vm503 = vcmp.lt.s32.totalorder %v502, 2
        %vm504 = vcmp.eq.s32.totalorder %v502, 0
        %v505 = vxor.u32 %v500, 2147483648
        %v506 = vsel %vm504, %v499, %v505
        %vm507 = vcmp.eq.s32.totalorder %v502, 2
        %v508 = vxor.u32 %v499, 2147483648
        %v509 = vsel %vm507, %v508, %v500
        %v510 = vsel %vm503, %v506, %v509
        %v511 = vsel %vm501, nan, %v510
        %v512 = vand.u32 2147483647, %v300
        %vm513 = vcmp.le.f32.partialorder %v512, 0.7853982
        %vm514 = vcmp.lt.s32.totalorder %v300, 0
        %v515 = vand.u32 %v300, 2139095040
        %v516 = vshrl.u32 %v515, 23
        %v517 = vsub.s32 %v516, 127
        %v518 = vand.u32 2147483647, %v300
        %v519 = vand.u32 %v518, 8388607
        %v520 = vor.u32 %v519, 8388608
        %v521 = vsub.s32 0, %v520
        %v522 = vadd.s32 %v517, 1
        %vm523 = vcmp.gt.s32.totalorder %v522, 0
        %v524 = vsel %vm523, %v522, 0
        %v525 = vshrl.u32 %v524, 5
        %v526 = vand.u32 %v524, 31
        %v527 = vsub.s32 32, %v526
        %v528 = vshrl.u32 683565275, %v527
        %v529 = vshll.u32 683565275, %v526
        %v530 = vshrl.u32 2475754826, %v527
        %v531 = vor.u32 %v529, %v530
        %v532 = vshll.u32 2475754826, %v526
        %v533 = vshrl.u32 2131351028, %v527
        %v534 = vor.u32 %v532, %v533
        %v535 = vshll.u32 2131351028, %v526
        %v536 = vshrl.u32 2102212464, %v527
        %v537 = vor.u32 %v535, %v536
        %v538 = vshll.u32 2102212464, %v526
        %v539 = vshrl.u32 920167782, %v527
        %v540 = vor.u32 %v538, %v539
        %v541 = vshll.u32 920167782, %v526
        %v542 = vshrl.u32 1326507024, %v527
        %v543 = vor.u32 %v541, %v542
        %vm544 = vcmp.lt.s32.totalorder %v525, 1
        %vm545 = vcmp.lt.s32.totalorder %v525, 2
        %vm546 = vcmp.lt.s32.totalorder %v525, 3
        %vm547 = vcmp.lt.s32.totalorder %v525, 4
        %v548 = vsel %vm544, %v528, %v531
        %v549 = vsel %vm547, %v537, 2102212464
        %v550 = vsel %vm546, %v534, %v549
        %v551 = vsel %vm545, %v548, %v550
        %v552 = vsel %vm544, %v531, %v534
        %v553 = vsel %vm547, %v540, 920167782
        %v554 = vsel %vm546, %v537, %v553
        %v555 = vsel %vm545, %v552, %v554
        %v556 = vsel %vm544, %v534, %v537
        %v557 = vsel %vm547, %v543, 1326507024
        %v558 = vsel %vm546, %v540, %v557
        %v559 = vsel %vm545, %v556, %v558
        %v560 = vshll.u32 %v520, 8
        %v561 = vmul.u32.u64.compose %v560, %v559
        %v562 = vextract.low.u32 %v561
        %v563 = vextract.high.u32 %v561
        %v564 = vmul.u32.u64.compose %v560, %v555
        %v565 = vextract.low.u32 %v564
        %v566 = vextract.high.u32 %v564
        %v567 = vmul.u32 %v560, %v551
        %v568 = vadd.s32 %v563, %v565
        %vm569 = vc.u32 %v563, %v565
        %v570 = vadd.s32 %v566, 1
        %v571 = vsel %vm569, %v570, %v566
        %v572 = vadd.s32 %v567, %v571
        %v573 = vadd.s32 %v572, 536870912
        %v574 = vshrl.u32 %v573, 30
        %v575 = vshll.u32 %v574, 30
        %v576 = vsub.s32 %v572, %v575
        %vm577 = vcmp.lt.s32.totalorder %v576, 0
        %v578 = vsub.s32 0, %v576
        %v579 = vsel %vm577, %v578, %v576
        %v580 = vclz %v579
        %v581 = vsub.s32 %v580, 2
        %vm582 = vcmp.gt.s32.totalorder 0, %v581
        %v583 = vsel %vm582, 0, %v581
        %v584 = vsub.s32 32, %v583
        %v585 = vshll.u32 %v576, %v583
        %v586 = vshrl.u32 %v568, %v584
        %v587 = vor.u32 %v585, %v586
        %v588 = vsub.s32 4294967266, %v583
        %v589 = vadd.s32 %v588, 127
        %v590 = vshll.u32 %v589, 23
        %v591 = vor.u32 4788187, %v590
        %v592 = vand.u32 2147483647, %v591
        %v594 = vcvt.s32.f32 %v587
        %v595 = vmul.f32 %v594, %v592
        %v596 = vxor.u32 %v595, 2147483648
        %v597 = vsel %vm514, %v596, %v595
        %v598 = vsub.s32 4, %v574
        %v599 = vsel %vm514, %v598, %v574
        %v600 = vsel %vm513, %v300, %v597
        %v601 = vsel %vm513, 0, %v599
        %v602 = vcosq.f32.pop %v600
        %v603 = vsinq.f32.pop %v600
        %vm604 = vweird.f32 %v300
        %v605 = vand.u32 %v601, 3
        %vm606 = vcmp.lt.s32.totalorder %v605, 2
        %vm607 = vcmp.eq.s32.totalorder %v605, 0
        %v608 = vxor.u32 %v603, 2147483648
        %v609 = vsel %vm607, %v602, %v608
        %vm610 = vcmp.eq.s32.totalorder %v605, 2
        %v611 = vxor.u32 %v602, 2147483648
        %v612 = vsel %vm610, %v611, %v603
        %v613 = vsel %vm606, %v609, %v612
        %v614 = vsel %vm604, nan, %v613
        %v615 = vand.u32 2147483647, %v301
        %vm616 = vcmp.le.f32.partialorder %v615, 0.7853982
        %vm617 = vcmp.lt.s32.totalorder %v301, 0
        %v618 = vand.u32 %v301, 2139095040
        %v619 = vshrl.u32 %v618, 23
        %v620 = vsub.s32 %v619, 127
        %v621 = vand.u32 2147483647, %v301
        %v622 = vand.u32 %v621, 8388607
        %v623 = vor.u32 %v622, 8388608
        %v624 = vsub.s32 0, %v623
        %v625 = vadd.s32 %v620, 1
        %vm626 = vcmp.gt.s32.totalorder %v625, 0
        %v627 = vsel %vm626, %v625, 0
        %v628 = vshrl.u32 %v627, 5
        %v629 = vand.u32 %v627, 31
        %v630 = vsub.s32 32, %v629
        %v631 = vshrl.u32 683565275, %v630
        %v632 = vshll.u32 683565275, %v629
        %v633 = vshrl.u32 2475754826, %v630
        %v634 = vor.u32 %v632, %v633
        %v635 = vshll.u32 2475754826, %v629
        %v636 = vshrl.u32 2131351028, %v630
        %v637 = vor.u32 %v635, %v636
        %v638 = vshll.u32 2131351028, %v629
        %v639 = vshrl.u32 2102212464, %v630
        %v640 = vor.u32 %v638, %v639
        %v641 = vshll.u32 2102212464, %v629
        %v642 = vshrl.u32 920167782, %v630
        %v643 = vor.u32 %v641, %v642
        %v644 = vshll.u32 920167782, %v629
        %v645 = vshrl.u32 1326507024, %v630
        %v646 = vor.u32 %v644, %v645
        %vm647 = vcmp.lt.s32.totalorder %v628, 1
        %vm648 = vcmp.lt.s32.totalorder %v628, 2
        %vm649 = vcmp.lt.s32.totalorder %v628, 3
        %vm650 = vcmp.lt.s32.totalorder %v628, 4
        %v651 = vsel %vm647, %v631, %v634
        %v652 = vsel %vm650, %v640, 2102212464
        %v653 = vsel %vm649, %v637, %v652
        %v654 = vsel %vm648, %v651, %v653
        %v655 = vsel %vm647, %v634, %v637
        %v656 = vsel %vm650, %v643, 920167782
        %v657 = vsel %vm649, %v640, %v656
        %v658 = vsel %vm648, %v655, %v657
        %v659 = vsel %vm647, %v637, %v640
        %v660 = vsel %vm650, %v646, 1326507024
        %v661 = vsel %vm649, %v643, %v660
        %v662 = vsel %vm648, %v659, %v661
        %v663 = vshll.u32 %v623, 8
        %v664 = vmul.u32.u64.compose %v663, %v662
        %v665 = vextract.low.u32 %v664
        %v666 = vextract.high.u32 %v664
        %v667 = vmul.u32.u64.compose %v663, %v658
        %v668 = vextract.low.u32 %v667
        %v669 = vextract.high.u32 %v667
        %v670 = vmul.u32 %v663, %v654
        %v671 = vadd.s32 %v666, %v668
        %vm672 = vc.u32 %v666, %v668
        %v673 = vadd.s32 %v669, 1
        %v674 = vsel %vm672, %v673, %v669
        %v675 = vadd.s32 %v670, %v674
        %v676 = vadd.s32 %v675, 536870912
        %v677 = vshrl.u32 %v676, 30
        %v678 = vshll.u32 %v677, 30
        %v679 = vsub.s32 %v675, %v678
        %vm680 = vcmp.lt.s32.totalorder %v679, 0
        %v681 = vsub.s32 0, %v679
        %v682 = vsel %vm680, %v681, %v679
        %v683 = vclz %v682
        %v684 = vsub.s32 %v683, 2
        %vm685 = vcmp.gt.s32.totalorder 0, %v684
        %v686 = vsel %vm685, 0, %v684
        %v687 = vsub.s32 32, %v686
        %v688 = vshll.u32 %v679, %v686
        %v689 = vshrl.u32 %v671, %v687
        %v690 = vor.u32 %v688, %v689
        %v691 = vsub.s32 4294967266, %v686
        %v692 = vadd.s32 %v691, 127
        %v693 = vshll.u32 %v692, 23
        %v694 = vor.u32 4788187, %v693
        %v695 = vand.u32 2147483647, %v694
        %v697 = vcvt.s32.f32 %v690
        %v698 = vmul.f32 %v697, %v695
        %v699 = vxor.u32 %v698, 2147483648
        %v700 = vsel %vm617, %v699, %v698
        %v701 = vsub.s32 4, %v677
        %v702 = vsel %vm617, %v701, %v677
        %v703 = vsel %vm616, %v301, %v700
        %v704 = vsel %vm616, 0, %v702
        %v705 = vcosq.f32.pop %v703
        %v706 = vsinq.f32.pop %v703
        %vm707 = vweird.f32 %v301
        %v708 = vand.u32 %v704, 3
        %vm709 = vcmp.lt.s32.totalorder %v708, 2
        %vm710 = vcmp.eq.s32.totalorder %v708, 0
        %v711 = vxor.u32 %v706, 2147483648
        %v712 = vsel %vm710, %v705, %v711
        %vm713 = vcmp.eq.s32.totalorder %v708, 2
        %v714 = vxor.u32 %v705, 2147483648
        %v715 = vsel %vm713, %v714, %v706
        %v716 = vsel %vm709, %v712, %v715
        %v717 = vsel %vm707, nan, %v716
        %v718 = vmul.f32 %v294, %v408
        %v719 = vmul.f32 %v295, %v511
        %v720 = vmul.f32 %v296, %v614
        %v721 = vmul.f32 %v297, %v717
        %s722 = scalar_lea.vmem %s285, 32 [#allocation8]
        %723 = vst [vmem:[%s722] sm:$0xff] %v718
        %724 = vst [vmem:[%s722 + $0x8] sm:$0xff] %v719
        %725 = vst [vmem:[%s722 + $0x10] sm:$0xff] %v720
        %726 = vst [vmem:[%s722 + $0x18] sm:$0xff] %v721
        %v727 = vand.u32 2147483647, %v298
        %vm728 = vcmp.le.f32.partialorder %v727, 0.7853982
        %vm729 = vcmp.lt.s32.totalorder %v298, 0
        %v730 = vand.u32 %v298, 2139095040
        %v731 = vshrl.u32 %v730, 23
        %v732 = vsub.s32 %v731, 127
        %v733 = vand.u32 2147483647, %v298
        %v734 = vand.u32 %v733, 8388607
        %v735 = vor.u32 %v734, 8388608
        %v736 = vsub.s32 0, %v735
        %v737 = vadd.s32 %v732, 1
        %vm738 = vcmp.gt.s32.totalorder %v737, 0
        %v739 = vsel %vm738, %v737, 0
        %v740 = vshrl.u32 %v739, 5
        %v741 = vand.u32 %v739, 31
        %v742 = vsub.s32 32, %v741
        %v743 = vshrl.u32 683565275, %v742
        %v744 = vshll.u32 683565275, %v741
        %v745 = vshrl.u32 2475754826, %v742
        %v746 = vor.u32 %v744, %v745
        %v747 = vshll.u32 2475754826, %v741
        %v748 = vshrl.u32 2131351028, %v742
        %v749 = vor.u32 %v747, %v748
        %v750 = vshll.u32 2131351028, %v741
        %v751 = vshrl.u32 2102212464, %v742
        %v752 = vor.u32 %v750, %v751
        %v753 = vshll.u32 2102212464, %v741
        %v754 = vshrl.u32 920167782, %v742
        %v755 = vor.u32 %v753, %v754
        %v756 = vshll.u32 920167782, %v741
        %v757 = vshrl.u32 1326507024, %v742
        %v758 = vor.u32 %v756, %v757
        %vm759 = vcmp.lt.s32.totalorder %v740, 1
        %vm760 = vcmp.lt.s32.totalorder %v740, 2
        %vm761 = vcmp.lt.s32.totalorder %v740, 3
        %vm762 = vcmp.lt.s32.totalorder %v740, 4
        %v763 = vsel %vm759, %v743, %v746
        %v764 = vsel %vm762, %v752, 2102212464
        %v765 = vsel %vm761, %v749, %v764
        %v766 = vsel %vm760, %v763, %v765
        %v767 = vsel %vm759, %v746, %v749
        %v768 = vsel %vm762, %v755, 920167782
        %v769 = vsel %vm761, %v752, %v768
        %v770 = vsel %vm760, %v767, %v769
        %v771 = vsel %vm759, %v749, %v752
        %v772 = vsel %vm762, %v758, 1326507024
        %v773 = vsel %vm761, %v755, %v772
        %v774 = vsel %vm760, %v771, %v773
        %v775 = vshll.u32 %v735, 8
        %v776 = vmul.u32.u64.compose %v775, %v774
        %v777 = vextract.low.u32 %v776
        %v778 = vextract.high.u32 %v776
        %v779 = vmul.u32.u64.compose %v775, %v770
        %v780 = vextract.low.u32 %v779
        %v781 = vextract.high.u32 %v779
        %v782 = vmul.u32 %v775, %v766
        %v783 = vadd.s32 %v778, %v780
        %vm784 = vc.u32 %v778, %v780
        %v785 = vadd.s32 %v781, 1
        %v786 = vsel %vm784, %v785, %v781
        %v787 = vadd.s32 %v782, %v786
        %v788 = vadd.s32 %v787, 536870912
        %v789 = vshrl.u32 %v788, 30
        %v790 = vshll.u32 %v789, 30
        %v791 = vsub.s32 %v787, %v790
        %vm792 = vcmp.lt.s32.totalorder %v791, 0
        %v793 = vsub.s32 0, %v791
        %v794 = vsel %vm792, %v793, %v791
        %v795 = vclz %v794
        %v796 = vsub.s32 %v795, 2
        %vm797 = vcmp.gt.s32.totalorder 0, %v796
        %v798 = vsel %vm797, 0, %v796
        %v799 = vsub.s32 32, %v798
        %v800 = vshll.u32 %v791, %v798
        %v801 = vshrl.u32 %v783, %v799
        %v802 = vor.u32 %v800, %v801
        %v803 = vsub.s32 4294967266, %v798
        %v804 = vadd.s32 %v803, 127
        %v805 = vshll.u32 %v804, 23
        %v806 = vor.u32 4788187, %v805
        %v807 = vand.u32 2147483647, %v806
        %v809 = vcvt.s32.f32 %v802
        %v810 = vmul.f32 %v809, %v807
        %v811 = vxor.u32 %v810, 2147483648
        %v812 = vsel %vm729, %v811, %v810
        %v813 = vsub.s32 4, %v789
        %v814 = vsel %vm729, %v813, %v789
        %v815 = vsel %vm728, %v298, %v812
        %v816 = vsel %vm728, 0, %v814
        %v817 = vcosq.f32.pop %v815
        %v818 = vsinq.f32.pop %v815
        %vm819 = vweird.f32 %v298
        %v820 = vadd.s32 %v816, 3
        %v821 = vand.u32 %v820, 3
        %vm822 = vcmp.lt.s32.totalorder %v821, 2
        %vm823 = vcmp.eq.s32.totalorder %v821, 0
        %v824 = vxor.u32 %v818, 2147483648
        %v825 = vsel %vm823, %v817, %v824
        %vm826 = vcmp.eq.s32.totalorder %v821, 2
        %v827 = vxor.u32 %v817, 2147483648
        %v828 = vsel %vm826, %v827, %v818
        %v829 = vsel %vm822, %v825, %v828
        %v830 = vsel %vm819, nan, %v829
        %v831 = vand.u32 2147483647, %v299
        %vm832 = vcmp.le.f32.partialorder %v831, 0.7853982
        %vm833 = vcmp.lt.s32.totalorder %v299, 0
        %v834 = vand.u32 %v299, 2139095040
        %v835 = vshrl.u32 %v834, 23
        %v836 = vsub.s32 %v835, 127
        %v837 = vand.u32 2147483647, %v299
        %v838 = vand.u32 %v837, 8388607
        %v839 = vor.u32 %v838, 8388608
        %v840 = vsub.s32 0, %v839
        %v841 = vadd.s32 %v836, 1
        %vm842 = vcmp.gt.s32.totalorder %v841, 0
        %v843 = vsel %vm842, %v841, 0
        %v844 = vshrl.u32 %v843, 5
        %v845 = vand.u32 %v843, 31
        %v846 = vsub.s32 32, %v845
        %v847 = vshrl.u32 683565275, %v846
        %v848 = vshll.u32 683565275, %v845
        %v849 = vshrl.u32 2475754826, %v846
        %v850 = vor.u32 %v848, %v849
        %v851 = vshll.u32 2475754826, %v845
        %v852 = vshrl.u32 2131351028, %v846
        %v853 = vor.u32 %v851, %v852
        %v854 = vshll.u32 2131351028, %v845
        %v855 = vshrl.u32 2102212464, %v846
        %v856 = vor.u32 %v854, %v855
        %v857 = vshll.u32 2102212464, %v845
        %v858 = vshrl.u32 920167782, %v846
        %v859 = vor.u32 %v857, %v858
        %v860 = vshll.u32 920167782, %v845
        %v861 = vshrl.u32 1326507024, %v846
        %v862 = vor.u32 %v860, %v861
        %vm863 = vcmp.lt.s32.totalorder %v844, 1
        %vm864 = vcmp.lt.s32.totalorder %v844, 2
        %vm865 = vcmp.lt.s32.totalorder %v844, 3
        %vm866 = vcmp.lt.s32.totalorder %v844, 4
        %v867 = vsel %vm863, %v847, %v850
        %v868 = vsel %vm866, %v856, 2102212464
        %v869 = vsel %vm865, %v853, %v868
        %v870 = vsel %vm864, %v867, %v869
        %v871 = vsel %vm863, %v850, %v853
        %v872 = vsel %vm866, %v859, 920167782
        %v873 = vsel %vm865, %v856, %v872
        %v874 = vsel %vm864, %v871, %v873
        %v875 = vsel %vm863, %v853, %v856
        %v876 = vsel %vm866, %v862, 1326507024
        %v877 = vsel %vm865, %v859, %v876
        %v878 = vsel %vm864, %v875, %v877
        %v879 = vshll.u32 %v839, 8
        %v880 = vmul.u32.u64.compose %v879, %v878
        %v881 = vextract.low.u32 %v880
        %v882 = vextract.high.u32 %v880
        %v883 = vmul.u32.u64.compose %v879, %v874
        %v884 = vextract.low.u32 %v883
        %v885 = vextract.high.u32 %v883
        %v886 = vmul.u32 %v879, %v870
        %v887 = vadd.s32 %v882, %v884
        %vm888 = vc.u32 %v882, %v884
        %v889 = vadd.s32 %v885, 1
        %v890 = vsel %vm888, %v889, %v885
        %v891 = vadd.s32 %v886, %v890
        %v892 = vadd.s32 %v891, 536870912
        %v893 = vshrl.u32 %v892, 30
        %v894 = vshll.u32 %v893, 30
        %v895 = vsub.s32 %v891, %v894
        %vm896 = vcmp.lt.s32.totalorder %v895, 0
        %v897 = vsub.s32 0, %v895
        %v898 = vsel %vm896, %v897, %v895
        %v899 = vclz %v898
        %v900 = vsub.s32 %v899, 2
        %vm901 = vcmp.gt.s32.totalorder 0, %v900
        %v902 = vsel %vm901, 0, %v900
        %v903 = vsub.s32 32, %v902
        %v904 = vshll.u32 %v895, %v902
        %v905 = vshrl.u32 %v887, %v903
        %v906 = vor.u32 %v904, %v905
        %v907 = vsub.s32 4294967266, %v902
        %v908 = vadd.s32 %v907, 127
        %v909 = vshll.u32 %v908, 23
        %v910 = vor.u32 4788187, %v909
        %v911 = vand.u32 2147483647, %v910
        %v913 = vcvt.s32.f32 %v906
        %v914 = vmul.f32 %v913, %v911
        %v915 = vxor.u32 %v914, 2147483648
        %v916 = vsel %vm833, %v915, %v914
        %v917 = vsub.s32 4, %v893
        %v918 = vsel %vm833, %v917, %v893
        %v919 = vsel %vm832, %v299, %v916
        %v920 = vsel %vm832, 0, %v918
        %v921 = vcosq.f32.pop %v919
        %v922 = vsinq.f32.pop %v919
        %vm923 = vweird.f32 %v299
        %v924 = vadd.s32 %v920, 3
        %v925 = vand.u32 %v924, 3
        %vm926 = vcmp.lt.s32.totalorder %v925, 2
        %vm927 = vcmp.eq.s32.totalorder %v925, 0
        %v928 = vxor.u32 %v922, 2147483648
        %v929 = vsel %vm927, %v921, %v928
        %vm930 = vcmp.eq.s32.totalorder %v925, 2
        %v931 = vxor.u32 %v921, 2147483648
        %v932 = vsel %vm930, %v931, %v922
        %v933 = vsel %vm926, %v929, %v932
        %v934 = vsel %vm923, nan, %v933
        %v935 = vand.u32 2147483647, %v300
        %vm936 = vcmp.le.f32.partialorder %v935, 0.7853982
        %vm937 = vcmp.lt.s32.totalorder %v300, 0
        %v938 = vand.u32 %v300, 2139095040
        %v939 = vshrl.u32 %v938, 23
        %v940 = vsub.s32 %v939, 127
        %v941 = vand.u32 2147483647, %v300
        %v942 = vand.u32 %v941, 8388607
        %v943 = vor.u32 %v942, 8388608
        %v944 = vsub.s32 0, %v943
        %v945 = vadd.s32 %v940, 1
        %vm946 = vcmp.gt.s32.totalorder %v945, 0
        %v947 = vsel %vm946, %v945, 0
        %v948 = vshrl.u32 %v947, 5
        %v949 = vand.u32 %v947, 31
        %v950 = vsub.s32 32, %v949
        %v951 = vshrl.u32 683565275, %v950
        %v952 = vshll.u32 683565275, %v949
        %v953 = vshrl.u32 2475754826, %v950
        %v954 = vor.u32 %v952, %v953
        %v955 = vshll.u32 2475754826, %v949
        %v956 = vshrl.u32 2131351028, %v950
        %v957 = vor.u32 %v955, %v956
        %v958 = vshll.u32 2131351028, %v949
        %v959 = vshrl.u32 2102212464, %v950
        %v960 = vor.u32 %v958, %v959
        %v961 = vshll.u32 2102212464, %v949
        %v962 = vshrl.u32 920167782, %v950
        %v963 = vor.u32 %v961, %v962
        %v964 = vshll.u32 920167782, %v949
        %v965 = vshrl.u32 1326507024, %v950
        %v966 = vor.u32 %v964, %v965
        %vm967 = vcmp.lt.s32.totalorder %v948, 1
        %vm968 = vcmp.lt.s32.totalorder %v948, 2
        %vm969 = vcmp.lt.s32.totalorder %v948, 3
        %vm970 = vcmp.lt.s32.totalorder %v948, 4
        %v971 = vsel %vm967, %v951, %v954
        %v972 = vsel %vm970, %v960, 2102212464
        %v973 = vsel %vm969, %v957, %v972
        %v974 = vsel %vm968, %v971, %v973
        %v975 = vsel %vm967, %v954, %v957
        %v976 = vsel %vm970, %v963, 920167782
        %v977 = vsel %vm969, %v960, %v976
        %v978 = vsel %vm968, %v975, %v977
        %v979 = vsel %vm967, %v957, %v960
        %v980 = vsel %vm970, %v966, 1326507024
        %v981 = vsel %vm969, %v963, %v980
        %v982 = vsel %vm968, %v979, %v981
        %v983 = vshll.u32 %v943, 8
        %v984 = vmul.u32.u64.compose %v983, %v982
        %v985 = vextract.low.u32 %v984
        %v986 = vextract.high.u32 %v984
        %v987 = vmul.u32.u64.compose %v983, %v978
        %v988 = vextract.low.u32 %v987
        %v989 = vextract.high.u32 %v987
        %v990 = vmul.u32 %v983, %v974
        %v991 = vadd.s32 %v986, %v988
        %vm992 = vc.u32 %v986, %v988
        %v993 = vadd.s32 %v989, 1
        %v994 = vsel %vm992, %v993, %v989
        %v995 = vadd.s32 %v990, %v994
        %v996 = vadd.s32 %v995, 536870912
        %v997 = vshrl.u32 %v996, 30
        %v998 = vshll.u32 %v997, 30
        %v999 = vsub.s32 %v995, %v998
        %vm1000 = vcmp.lt.s32.totalorder %v999, 0
        %v1001 = vsub.s32 0, %v999
        %v1002 = vsel %vm1000, %v1001, %v999
        %v1003 = vclz %v1002
        %v1004 = vsub.s32 %v1003, 2
        %vm1005 = vcmp.gt.s32.totalorder 0, %v1004
        %v1006 = vsel %vm1005, 0, %v1004
        %v1007 = vsub.s32 32, %v1006
        %v1008 = vshll.u32 %v999, %v1006
        %v1009 = vshrl.u32 %v991, %v1007
        %v1010 = vor.u32 %v1008, %v1009
        %v1011 = vsub.s32 4294967266, %v1006
        %v1012 = vadd.s32 %v1011, 127
        %v1013 = vshll.u32 %v1012, 23
        %v1014 = vor.u32 4788187, %v1013
        %v1015 = vand.u32 2147483647, %v1014
        %v1017 = vcvt.s32.f32 %v1010
        %v1018 = vmul.f32 %v1017, %v1015
        %v1019 = vxor.u32 %v1018, 2147483648
        %v1020 = vsel %vm937, %v1019, %v1018
        %v1021 = vsub.s32 4, %v997
        %v1022 = vsel %vm937, %v1021, %v997
        %v1023 = vsel %vm936, %v300, %v1020
        %v1024 = vsel %vm936, 0, %v1022
        %v1025 = vcosq.f32.pop %v1023
        %v1026 = vsinq.f32.pop %v1023
        %vm1027 = vweird.f32 %v300
        %v1028 = vadd.s32 %v1024, 3
        %v1029 = vand.u32 %v1028, 3
        %vm1030 = vcmp.lt.s32.totalorder %v1029, 2
        %vm1031 = vcmp.eq.s32.totalorder %v1029, 0
        %v1032 = vxor.u32 %v1026, 2147483648
        %v1033 = vsel %vm1031, %v1025, %v1032
        %vm1034 = vcmp.eq.s32.totalorder %v1029, 2
        %v1035 = vxor.u32 %v1025, 2147483648
        %v1036 = vsel %vm1034, %v1035, %v1026
        %v1037 = vsel %vm1030, %v1033, %v1036
        %v1038 = vsel %vm1027, nan, %v1037
        %v1039 = vand.u32 2147483647, %v301
        %vm1040 = vcmp.le.f32.partialorder %v1039, 0.7853982
        %vm1041 = vcmp.lt.s32.totalorder %v301, 0
        %v1042 = vand.u32 %v301, 2139095040
        %v1043 = vshrl.u32 %v1042, 23
        %v1044 = vsub.s32 %v1043, 127
        %v1045 = vand.u32 2147483647, %v301
        %v1046 = vand.u32 %v1045, 8388607
        %v1047 = vor.u32 %v1046, 8388608
        %v1048 = vsub.s32 0, %v1047
        %v1049 = vadd.s32 %v1044, 1
        %vm1050 = vcmp.gt.s32.totalorder %v1049, 0
        %v1051 = vsel %vm1050, %v1049, 0
        %v1052 = vshrl.u32 %v1051, 5
        %v1053 = vand.u32 %v1051, 31
        %v1054 = vsub.s32 32, %v1053
        %v1055 = vshrl.u32 683565275, %v1054
        %v1056 = vshll.u32 683565275, %v1053
        %v1057 = vshrl.u32 2475754826, %v1054
        %v1058 = vor.u32 %v1056, %v1057
        %v1059 = vshll.u32 2475754826, %v1053
        %v1060 = vshrl.u32 2131351028, %v1054
        %v1061 = vor.u32 %v1059, %v1060
        %v1062 = vshll.u32 2131351028, %v1053
        %v1063 = vshrl.u32 2102212464, %v1054
        %v1064 = vor.u32 %v1062, %v1063
        %v1065 = vshll.u32 2102212464, %v1053
        %v1066 = vshrl.u32 920167782, %v1054
        %v1067 = vor.u32 %v1065, %v1066
        %v1068 = vshll.u32 920167782, %v1053
        %v1069 = vshrl.u32 1326507024, %v1054
        %v1070 = vor.u32 %v1068, %v1069
        %vm1071 = vcmp.lt.s32.totalorder %v1052, 1
        %vm1072 = vcmp.lt.s32.totalorder %v1052, 2
        %vm1073 = vcmp.lt.s32.totalorder %v1052, 3
        %vm1074 = vcmp.lt.s32.totalorder %v1052, 4
        %v1075 = vsel %vm1071, %v1055, %v1058
        %v1076 = vsel %vm1074, %v1064, 2102212464
        %v1077 = vsel %vm1073, %v1061, %v1076
        %v1078 = vsel %vm1072, %v1075, %v1077
        %v1079 = vsel %vm1071, %v1058, %v1061
        %v1080 = vsel %vm1074, %v1067, 920167782
        %v1081 = vsel %vm1073, %v1064, %v1080
        %v1082 = vsel %vm1072, %v1079, %v1081
        %v1083 = vsel %vm1071, %v1061, %v1064
        %v1084 = vsel %vm1074, %v1070, 1326507024
        %v1085 = vsel %vm1073, %v1067, %v1084
        %v1086 = vsel %vm1072, %v1083, %v1085
        %v1087 = vshll.u32 %v1047, 8
        %v1088 = vmul.u32.u64.compose %v1087, %v1086
        %v1089 = vextract.low.u32 %v1088
        %v1090 = vextract.high.u32 %v1088
        %v1091 = vmul.u32.u64.compose %v1087, %v1082
        %v1092 = vextract.low.u32 %v1091
        %v1093 = vextract.high.u32 %v1091
        %v1094 = vmul.u32 %v1087, %v1078
        %v1095 = vadd.s32 %v1090, %v1092
        %vm1096 = vc.u32 %v1090, %v1092
        %v1097 = vadd.s32 %v1093, 1
        %v1098 = vsel %vm1096, %v1097, %v1093
        %v1099 = vadd.s32 %v1094, %v1098
        %v1100 = vadd.s32 %v1099, 536870912
        %v1101 = vshrl.u32 %v1100, 30
        %v1102 = vshll.u32 %v1101, 30
        %v1103 = vsub.s32 %v1099, %v1102
        %vm1104 = vcmp.lt.s32.totalorder %v1103, 0
        %v1105 = vsub.s32 0, %v1103
        %v1106 = vsel %vm1104, %v1105, %v1103
        %v1107 = vclz %v1106
        %v1108 = vsub.s32 %v1107, 2
        %vm1109 = vcmp.gt.s32.totalorder 0, %v1108
        %v1110 = vsel %vm1109, 0, %v1108
        %v1111 = vsub.s32 32, %v1110
        %v1112 = vshll.u32 %v1103, %v1110
        %v1113 = vshrl.u32 %v1095, %v1111
        %v1114 = vor.u32 %v1112, %v1113
        %v1115 = vsub.s32 4294967266, %v1110
        %v1116 = vadd.s32 %v1115, 127
        %v1117 = vshll.u32 %v1116, 23
        %v1118 = vor.u32 4788187, %v1117
        %v1119 = vand.u32 2147483647, %v1118
        %v1121 = vcvt.s32.f32 %v1114
        %v1122 = vmul.f32 %v1121, %v1119
        %v1123 = vxor.u32 %v1122, 2147483648
        %v1124 = vsel %vm1041, %v1123, %v1122
        %v1125 = vsub.s32 4, %v1101
        %v1126 = vsel %vm1041, %v1125, %v1101
        %v1127 = vsel %vm1040, %v301, %v1124
        %v1128 = vsel %vm1040, 0, %v1126
        %v1129 = vcosq.f32.pop %v1127
        %v1130 = vsinq.f32.pop %v1127
        %vm1131 = vweird.f32 %v301
        %v1132 = vadd.s32 %v1128, 3
        %v1133 = vand.u32 %v1132, 3
        %vm1134 = vcmp.lt.s32.totalorder %v1133, 2
        %vm1135 = vcmp.eq.s32.totalorder %v1133, 0
        %v1136 = vxor.u32 %v1130, 2147483648
        %v1137 = vsel %vm1135, %v1129, %v1136
        %vm1138 = vcmp.eq.s32.totalorder %v1133, 2
        %v1139 = vxor.u32 %v1129, 2147483648
        %v1140 = vsel %vm1138, %v1139, %v1130
        %v1141 = vsel %vm1134, %v1137, %v1140
        %v1142 = vsel %vm1131, nan, %v1141
        %v1143 = vmul.f32 %v294, %v830
        %v1144 = vmul.f32 %v295, %v934
        %v1145 = vmul.f32 %v296, %v1038
        %v1146 = vmul.f32 %v297, %v1142
        %s1147 = scalar_lea.vmem %s285, 64 [#allocation8]
        %1148 = vst [vmem:[%s1147] sm:$0xff] %v1143
        %1149 = vst [vmem:[%s1147 + $0x8] sm:$0xff] %v1144
        %1150 = vst [vmem:[%s1147 + $0x10] sm:$0xff] %v1145
        %1151 = vst [vmem:[%s1147 + $0x18] sm:$0xff] %v1146
        %s1152 = sand.u32 %s129, 1
        %s1153 = scalar_lea.sflag [#allocation4], %s1152
        %s1154 = sand.u32 %s129, 1
        %s1155 = smul.addr %s1154, 96
        %s1156 = scalar_lea.vmem [#allocation8], %s1155
        // Predicated region
        $region45: #{tpu_custom_call.1} parent=31 // pred_check
          %p1157 = pneg %p139
        $region46: #{tpu_custom_call.1} parent=31 // pred_check_branch
          %1159 = sbr.rel (%p1157) target = $region48
        $region47: #{tpu_custom_call.1} parent=31 // pred_region
          %s1161 = ssub.s32 1536, 1536
          %1162 = vsyncadd %s1153, %s1161
          %s1163 = smul.addr %s28, 4
          %s1164 = smul.addr %s27, 12
          %s1165 = sadd.s32 %s1163, %s1164
          %s1166 = smul.addr %s1165, 128
          %s1167 = scalar_lea.hbm %s3, %s1166
          %s1168 = sshll.u32 %s1156, 4
          %s1169 = int_to_ptr.vmem [resolvable:$true] %s1168
          %1174 = dma.vmem_to_hbm [thread:$0]  %s1169, 1536, %s1167, %s1153, 512, 512, 32
        $region48: #{tpu_custom_call.1} parent=31 // pred_fallthru
          _
      $region32: #{tpu_custom_call.1} parent=5 // pred_fallthru
        _
      %p1175 = scmp.le.s32.totalorder 2, %s18
      // Predicated region
      $region49: #{tpu_custom_call.1} parent=5 // pred_check
        %p1176 = pneg %p1175
      $region50: #{tpu_custom_call.1} parent=5 // pred_check_branch
        %1178 = sbr.rel (%p1176) target = $region52
      $region51: #{tpu_custom_call.1} parent=5 // pred_region
        %s1179 = ssub.s32 %s18, 2
        // Predicated region
        $region53: #{tpu_custom_call.1} parent=51 // pred_check
          %p1180 = pneg %p145
        $region54: #{tpu_custom_call.1} parent=51 // pred_check_branch
          %1182 = sbr.rel (%p1180) target = $region56
        $region55: #{tpu_custom_call.1} parent=51 // pred_region
          %s1183 = sand.u32 %s130, 1
          %s1184 = scalar_lea.sflag [#allocation4], %s1183
          %s1185 = sand.u32 %s130, 1
          %s1186 = smul.addr %s1185, 96
          %s1187 = scalar_lea.vmem [#allocation8], %s1186
          %1188 = dma.done %s1184, 1536
        $region56: #{tpu_custom_call.1} parent=51 // pred_fallthru
          _
      $region52: #{tpu_custom_call.1} parent=5 // pred_fallthru
        _
    $region6: #{tpu_custom_call.1} parent=1 // loop_footer
      %s22 = sadd.s32 1, %s18
    $region7: #{tpu_custom_call.1} parent=1 // loop_footer_branch
      %17 = sbr.rel target = $region3
    $region8: #{tpu_custom_call.1} parent=1 // loop_exit
      _
    %1189 = vsyncpa [#allocation3], 1
    %s1190 = scalar_lea.sflag [#allocation3], 1
    %1191 = vsyncpa %s1190, 1
    %1192 = vsyncpa [#allocation6], 1
    %s1193 = scalar_lea.sflag [#allocation6], 1
    %1194 = vsyncpa %s1193, 1
    %1195 = vsyncpa [#allocation4], 1
    %s1196 = scalar_lea.sflag [#allocation4], 1
    %1197 = vsyncpa %s1196, 1

</llo_original>
